<compile_context>
chip_gen: v7x
topology: tpu7x:2x2x1
jax: 0.10.0
libtpu: 0.0.40
codegen_flags: <defaults>
</compile_context>

<pallas_src>
import functools

import jax
import jax.numpy as jnp
from jax.experimental import pallas as pl
from jax.experimental.pallas import tpu as pltpu

LANE = 128


def _round_up(v, m):
    return (v + m - 1) // m * m


# ----------------------------------------------------------------------------
# Kernel 1: fused feature projection (one pass over x)
#   XW  = x @ W                   -> bf16 (MXU operand for the aggregation)
#   XSB = x @ W_skip + b_skip     -> f32  (residual branch, used in epilogue)
# ----------------------------------------------------------------------------
def project_kernel(x_ref, w_ref, ws_ref, bs_ref, xw_ref, xsb_ref):
    x = x_ref[...]                                                  # [tm, Cin] bf16
    xw = jnp.dot(x, w_ref[...], preferred_element_type=jnp.float32)
    xw_ref[...] = xw.astype(xw_ref.dtype)
    xsb_ref[...] = (jnp.dot(x, ws_ref[...],
                            preferred_element_type=jnp.float32) + bs_ref[...])


# ----------------------------------------------------------------------------
# Kernel 2: aggregation + epilogue
#   out = relu(A_hat @ XW + b) + XSB        (dropout = identity in eval mode)
# ----------------------------------------------------------------------------
def aggregate_kernel(a_ref, xw_ref, b_ref, xsb_ref, out_ref, *, tk):
    k = pl.program_id(1)              # reduction (neighbour) tile -- last grid axis
    k_last = pl.num_programs(1) - 1

    @pl.when(k == 0)
    def _init():
        out_ref[...] = jnp.zeros_like(out_ref)

    # XW is VMEM-resident (constant block index); slice the neighbour tile.
    start = pl.multiple_of(k * tk, tk)
    xw_k = xw_ref[pl.ds(start, tk), :]                              # [tk, Cout] bf16
    out_ref[...] += jnp.dot(a_ref[...], xw_k,
                            preferred_element_type=jnp.float32)     # [tm, Cout] f32

    # Finalize once per row tile: bias + ReLU + residual add (f32 epilogue,
    # friendly to v5e's f32-only VPU).
    @pl.when(k == k_last)
    def _finalize():
        # TODO(synk): dropout is identity in eval mode; training-mode dropout
        # would need pltpu.prng_seed + pltpu.stateful_bernoulli + 1/(1-p) rescale.
        h = jnp.maximum(out_ref[...] + b_ref[...], 0.0)
        out_ref[...] = h + xsb_ref[...]


def residual_gcn_layer(x, a_hat, w, b, w_skip, b_skip, *, tile=512):
    """x: [N, Cin] f32, a_hat: [N, N] f32 (normalized adjacency w/ self loops)."""
    n, c_in = x.shape
    c_out = w.shape[1]

    # Big tiles amortize per-step overhead; cap at the padded graph size so
    # small demos don't over-pad.
    tile = min(tile, _round_up(n, LANE))
    n_pad = _round_up(n, tile)
    cin_pad = _round_up(c_in, LANE)
    cout_pad = _round_up(c_out, LANE)
    nt = n_pad // tile

    # Cast to bf16 BEFORE padding (avoids extra O(N^2) f32 pad+cast passes).
    # Zero padding is inert through matmul / bias / ReLU / residual; pad
    # rows/cols are sliced off at the end.
    a_p = jnp.zeros((n_pad, n_pad), jnp.bfloat16).at[:n, :n].set(
        a_hat.astype(jnp.bfloat16))
    x_p = jnp.zeros((n_pad, cin_pad), jnp.bfloat16).at[:n, :c_in].set(
        x.astype(jnp.bfloat16))
    w_p = jnp.zeros((cin_pad, cout_pad), jnp.bfloat16).at[:c_in, :c_out].set(
        w.astype(jnp.bfloat16))
    ws_p = jnp.zeros((cin_pad, cout_pad), jnp.bfloat16).at[:c_in, :c_out].set(
        w_skip.astype(jnp.bfloat16))
    b_p = jnp.zeros((1, cout_pad), jnp.float32).at[:, :c_out].set(
        b.reshape(1, -1).astype(jnp.float32))
    bs_p = jnp.zeros((1, cout_pad), jnp.float32).at[:, :c_out].set(
        b_skip.reshape(1, -1).astype(jnp.float32))

    # ---------------- projection kernel: XW (bf16) + XSB (f32) --------------
    proj_flops = 4 * n_pad * cin_pad * cout_pad
    proj_bytes = (x_p.size * 2 + (w_p.size + ws_p.size) * 2 + bs_p.size * 4
                  + n_pad * cout_pad * (2 + 4))
    xw, xsb = pl.pallas_call(
        project_kernel,
        out_shape=(jax.ShapeDtypeStruct((n_pad, cout_pad), jnp.bfloat16),
                   jax.ShapeDtypeStruct((n_pad, cout_pad), jnp.float32)),
        grid_spec=pltpu.PrefetchScalarGridSpec(
            num_scalar_prefetch=0,
            grid=(nt,),
            in_specs=[
                pl.BlockSpec((tile, cin_pad), lambda i: (i, 0)),        # x row tile
                pl.BlockSpec((cin_pad, cout_pad), lambda i: (0, 0)),    # GCN weight
                pl.BlockSpec((cin_pad, cout_pad), lambda i: (0, 0)),    # skip weight
                pl.BlockSpec((1, cout_pad), lambda i: (0, 0)),          # skip bias
            ],
            out_specs=[
                pl.BlockSpec((tile, cout_pad), lambda i: (i, 0)),       # XW
                pl.BlockSpec((tile, cout_pad), lambda i: (i, 0)),       # XSB
            ],
        ),
        compiler_params=pltpu.CompilerParams(
            dimension_semantics=("parallel",),
            vmem_limit_bytes=32 * 1024 * 1024,
        ),
        cost_estimate=pl.CostEstimate(
            flops=proj_flops, transcendentals=0, bytes_accessed=proj_bytes),
    )(x_p, w_p, ws_p, bs_p)

    # ------------- aggregation kernel: relu(A_hat @ XW + b) + XSB -----------
    agg_flops = 2 * n_pad * n_pad * cout_pad
    agg_bytes = (a_p.size * 2                      # A_hat bf16, streamed once
                 + xw.size * 2                     # XW bf16, VMEM resident (once)
                 + xsb.size * 4                    # XSB f32, once per row tile
                 + n_pad * cout_pad * 4            # output f32
                 + b_p.size * 4)                   # bias
    out_p = pl.pallas_call(
        functools.partial(aggregate_kernel, tk=tile),
        out_shape=jax.ShapeDtypeStruct((n_pad, cout_pad), jnp.float32),
        grid_spec=pltpu.PrefetchScalarGridSpec(
            num_scalar_prefetch=0,
            grid=(nt, nt),    # (row tiles [parallel], reduction tiles [arbitrary, last])
            in_specs=[
                pl.BlockSpec((tile, tile), lambda i, k: (i, k)),        # A_hat tile
                pl.BlockSpec((n_pad, cout_pad), lambda i, k: (0, 0)),   # XW (resident)
                pl.BlockSpec((1, cout_pad), lambda i, k: (0, 0)),       # GCN bias
                pl.BlockSpec((tile, cout_pad), lambda i, k: (i, 0)),    # XSB row tile
            ],
            out_specs=pl.BlockSpec((tile, cout_pad), lambda i, k: (i, 0)),
        ),
        compiler_params=pltpu.CompilerParams(
            dimension_semantics=("parallel", "arbitrary"),
            vmem_limit_bytes=32 * 1024 * 1024,
        ),
        cost_estimate=pl.CostEstimate(
            flops=agg_flops, transcendentals=0, bytes_accessed=agg_bytes),
    )(a_p, xw, b_p, xsb)

    return out_p[:n, :c_out]


# ----------------------------------------------------------------------------
# Glue: build D^{-1/2} (A + I) D^{-1/2} from edge_index (GCNConv, improved=False)
# ----------------------------------------------------------------------------
def build_normalized_adjacency(edge_index, num_nodes, improved=False):
    src, dst = edge_index[0], edge_index[1]
    a = jnp.zeros((num_nodes, num_nodes), jnp.float32)
    # message flows src -> dst: row = destination, col = source
    a = a.at[dst, src].add(1.0)
    self_loop_w = 2.0 if improved else 1.0
    a = a + self_loop_w * jnp.eye(num_nodes, dtype=jnp.float32)
    deg = a.sum(axis=1)
    d_inv_sqrt = jnp.where(deg > 0, 1.0 / jnp.sqrt(deg), 0.0)
    return d_inv_sqrt[:, None] * a * d_inv_sqrt[None, :]


# Pure-JAX f32 reference for verification
def reference(x, a_hat, w, b, w_skip, b_skip):
    h = jnp.maximum(a_hat @ (x @ w) + b, 0.0)
    return h + (x @ w_skip + b_skip)


if __name__ == "__main__":
    N, C_IN, C_OUT = 256, 8, 16      # small shapes; C_IN != C_OUT -> Linear skip

    key = jax.random.PRNGKey(0)
    k_x, k_w, k_b, k_ws, k_bs = jax.random.split(key, 5)

    x = jax.random.normal(k_x, (N, C_IN), jnp.float32)

    # Deterministic edge_index: undirected ring over N nodes
    idx = jnp.arange(N)
    src = jnp.concatenate([idx, (idx + 1) % N])
    dst = jnp.concatenate([(idx + 1) % N, idx])
    edge_index = jnp.stack([src, dst], axis=0)          # [2, 2N]

    # Deterministic parameter init (synthetic; shapes match the module)
    w = jax.random.normal(k_w, (C_IN, C_OUT), jnp.float32) * 0.1        # GCNConv weight
    b = jax.random.normal(k_b, (1, C_OUT), jnp.float32) * 0.1           # GCNConv bias
    w_skip = jax.random.normal(k_ws, (C_IN, C_OUT), jnp.float32) * 0.1  # Linear skip
    b_skip = jax.random.normal(k_bs, (1, C_OUT), jnp.float32) * 0.1

    a_hat = build_normalized_adjacency(edge_index, N, improved=False)

    out = residual_gcn_layer(x, a_hat, w, b, w_skip, b_skip)
    out = jax.block_until_ready(out)

    ref = reference(x, a_hat, w, b, w_skip, b_skip)
    assert out.shape == (N, C_OUT)
    # bf16 MXU operands -> slightly looser tolerance vs. the f32 reference.
    max_err = float(jnp.max(jnp.abs(out - ref)))
    assert jnp.allclose(out, ref, atol=5e-2, rtol=5e-2), max_err

    print("KERNEL_OK")
</pallas_src>

<mosaic_0001>
module attributes {stable_mosaic.version = 11 : i64} {
  func.func @project_kernel(%arg0: i32, %arg1: memref<256x128xbf16, #tpu.memory_space<vmem>>, %arg2: memref<128x128xbf16, #tpu.memory_space<vmem>>, %arg3: memref<128x128xbf16, #tpu.memory_space<vmem>>, %arg4: memref<1x128xf32, #tpu.memory_space<vmem>>, %arg5: memref<256x128xbf16, #tpu.memory_space<vmem>>, %arg6: memref<256x128xf32, #tpu.memory_space<vmem>>) attributes {dimension_semantics = [#tpu.dimension_semantics<parallel>], iteration_bounds = array<i64: 1>, scalar_prefetch = 0 : i64, scratch_operands = 0 : i64, tpu.core_type = #tpu.core_type<tc>, window_params = [{transform_indices = @transform_0, window_bounds = array<i64: 256, 128>}, {pipeline_mode = #tpu.pipeline_mode<synchronous>, transform_indices = @transform_1, window_bounds = array<i64: 128, 128>}, {pipeline_mode = #tpu.pipeline_mode<synchronous>, transform_indices = @transform_2, window_bounds = array<i64: 128, 128>}, {pipeline_mode = #tpu.pipeline_mode<synchronous>, transform_indices = @transform_3, window_bounds = array<i64: 1, 128>}, {transform_indices = @transform_4, window_bounds = array<i64: 256, 128>}, {transform_indices = @transform_5, window_bounds = array<i64: 256, 128>}]} {
    %c0 = arith.constant 0 : index
    %c0_0 = arith.constant 0 : index
    %0 = vector.load %arg1[%c0, %c0_0] : memref<256x128xbf16, #tpu.memory_space<vmem>>, vector<256x128xbf16>
    %c0_1 = arith.constant 0 : index
    %c0_2 = arith.constant 0 : index
    %1 = vector.load %arg2[%c0_1, %c0_2] : memref<128x128xbf16, #tpu.memory_space<vmem>>, vector<128x128xbf16>
    %cst = arith.constant dense<0.000000e+00> : vector<256x128xf32>
    %2 = tpu.matmul %0, %1, %cst {dimension_numbers = #tpu.dot_dimension_numbers<[1], [0], [0], [1], [0, 0, 1, 1], [], []>} : vector<256x128xbf16>, vector<128x128xbf16>, vector<256x128xf32> -> vector<256x128xf32>
    %3 = arith.truncf %2 : vector<256x128xf32> to vector<256x128xbf16>
    %c0_3 = arith.constant 0 : index
    %c0_4 = arith.constant 0 : index
    %4 = vector.load %arg5[%c0_3, %c0_4] : memref<256x128xbf16, #tpu.memory_space<vmem>>, vector<256x128xbf16>
    tpu.vector_store %arg5[%c0_3, %c0_4], %3 {strides = array<i32>} : memref<256x128xbf16, #tpu.memory_space<vmem>>, vector<256x128xbf16>,
    %c0_5 = arith.constant 0 : index
    %c0_6 = arith.constant 0 : index
    %5 = vector.load %arg3[%c0_5, %c0_6] : memref<128x128xbf16, #tpu.memory_space<vmem>>, vector<128x128xbf16>
    %cst_7 = arith.constant dense<0.000000e+00> : vector<256x128xf32>
    %6 = tpu.matmul %0, %5, %cst_7 {dimension_numbers = #tpu.dot_dimension_numbers<[1], [0], [0], [1], [0, 0, 1, 1], [], []>} : vector<256x128xbf16>, vector<128x128xbf16>, vector<256x128xf32> -> vector<256x128xf32>
    %c0_8 = arith.constant 0 : index
    %c0_9 = arith.constant 0 : index
    %7 = vector.load %arg4[%c0_8, %c0_9] : memref<1x128xf32, #tpu.memory_space<vmem>>, vector<1x128xf32>
    %8 = vector.broadcast %7 : vector<1x128xf32> to vector<256x128xf32>
    %9 = arith.addf %6, %8 : vector<256x128xf32>
    %c0_10 = arith.constant 0 : index
    %c0_11 = arith.constant 0 : index
    %10 = vector.load %arg6[%c0_10, %c0_11] : memref<256x128xf32, #tpu.memory_space<vmem>>, vector<256x128xf32>
    tpu.vector_store %arg6[%c0_10, %c0_11], %9 {strides = array<i32>} : memref<256x128xf32, #tpu.memory_space<vmem>>, vector<256x128xf32>,
    return
  }
  func.func @transform_0(%arg0: i32) -> (i32, i32) {
    %c0_i32 = arith.constant 0 : i32
    %c0_i32_0 = arith.constant 0 : i32
    return %arg0, %c0_i32 : i32, i32
  }
  func.func @transform_1(%arg0: i32) -> (i32, i32) {
    %c0_i32 = arith.constant 0 : i32
    %c0_i32_0 = arith.constant 0 : i32
    %c0_i32_1 = arith.constant 0 : i32
    return %c0_i32, %c0_i32_0 : i32, i32
  }
  func.func @transform_2(%arg0: i32) -> (i32, i32) {
    %c0_i32 = arith.constant 0 : i32
    %c0_i32_0 = arith.constant 0 : i32
    %c0_i32_1 = arith.constant 0 : i32
    return %c0_i32, %c0_i32_0 : i32, i32
  }
  func.func @transform_3(%arg0: i32) -> (i32, i32) {
    %c0_i32 = arith.constant 0 : i32
    %c0_i32_0 = arith.constant 0 : i32
    %c0_i32_1 = arith.constant 0 : i32
    return %c0_i32, %c0_i32_0 : i32, i32
  }
  func.func @transform_4(%arg0: i32) -> (i32, i32) {
    %c0_i32 = arith.constant 0 : i32
    %c0_i32_0 = arith.constant 0 : i32
    return %arg0, %c0_i32 : i32, i32
  }
  func.func @transform_5(%arg0: i32) -> (i32, i32) {
    %c0_i32 = arith.constant 0 : i32
    %c0_i32_0 = arith.constant 0 : i32
    return %arg0, %c0_i32 : i32, i32
  }
}

</mosaic_0001>

<llo_original>
// kernel: tpu_custom_call.1
$region0: #{tpu_custom_call.1}
  #allocation0 [shape = 'u32[]', space=smem, size = 0x4, offset = 0x4, fixed_abs, tag = 'smem constant byte address 0x4 - core index']
  #allocation1 [shape = 'u32[144,128]{1,0:T(1,128)}', space=vmem, size = 0x12000, scoped, tag = 'internal scratch']
  %s0 = inlined_call_operand.hbm [shape: bf16[256,128], index: 0, kind: input, shape index: {}]
  %s1 = inlined_call_operand.hbm [shape: bf16[128,128], index: 1, kind: input, shape index: {}]
  %s2 = inlined_call_operand.hbm [shape: bf16[128,128], index: 2, kind: input, shape index: {}]
  %s3 = inlined_call_operand.vmem [shape: f32[1,128], index: 3, kind: input, shape index: {}]
  %s4 = inlined_call_operand.hbm [shape: bf16[256,128], index: 4, kind: output, shape index: {0}]
  %s5 = inlined_call_operand.hbm [shape: f32[256,128], index: 5, kind: output, shape index: {1}]
  %6 = xla_tuple %s4, %s5
  %s7 = sld [smem:[#allocation0]]
  $region46: #{tpu_custom_call.1} parent=0
    _
  %s9 = ssub.s32 1, %s7
  %s10 = scalar_select 0, %s9, %s7
  $region1: #{tpu_custom_call.1} parent=0
    #allocation2 [shape = 'u8[65536]{0}', space=vmem, size = 0x10000, scoped, tag = 'input window, operand 0, single buffered']
    #allocation3 [shape = 's32[1]{0}', space=sflag, size = 0x4, scoped, tag = 'scoped memory for tpu_custom_call.1']
    #allocation4 [shape = 's32[1]{0}', space=sflag, size = 0x4, scoped, tag = 'scoped memory for tpu_custom_call.1']
    #allocation5 [shape = 'u8[32768]{0}', space=vmem, size = 0x8000, scoped, tag = 'input window, operand 1, single buffered']
    #allocation6 [shape = 's32[1]{0}', space=sflag, size = 0x4, scoped, tag = 'scoped memory for tpu_custom_call.1']
    #allocation7 [shape = 'u8[32768]{0}', space=vmem, size = 0x8000, scoped, tag = 'input window, operand 2, single buffered']
    #allocation8 [shape = 'u8[65536]{0}', space=vmem, size = 0x10000, scoped, tag = 'output window, operand 0, single buffered']
    #allocation9 [shape = 'u8[131072]{0}', space=vmem, size = 0x20000, scoped, tag = 'output window, operand 1, single buffered']
    #allocation10 [shape = 's32[1]{0}', space=sflag, size = 0x4, scoped, tag = 'scoped memory for tpu_custom_call.1']
    %11 = vsyncpa [#allocation3], 0
    %12 = vsyncpa [#allocation6], 0
    %13 = vsyncpa [#allocation4], 0
    %14 = vsyncpa [#allocation10], 0
    // Predicated region
    $region2: #{tpu_custom_call.1} parent=1 // pred_check
      _
    $region3: #{tpu_custom_call.1} parent=1 // pred_check_branch
      %16 = sbr.rel (0) target = $region5
    $region4: #{tpu_custom_call.1} parent=1 // pred_region
      %s18 = ssub.s32 2048, 2048
      %19 = vsyncadd [#allocation3], %s18
      %s20 = sshll.u32 [#allocation2], 4
      %s21 = int_to_ptr.vmem [resolvable:$true] %s20
      %26 = dma.hbm_to_vmem [thread:$0]  %s0, 2048, %s21, [#allocation3], 64, 64, 4
    $region5: #{tpu_custom_call.1} parent=1 // pred_fallthru
      _
    // Predicated region
    $region6: #{tpu_custom_call.1} parent=1 // pred_check
      _
    $region7: #{tpu_custom_call.1} parent=1 // pred_check_branch
      %28 = sbr.rel (0) target = $region9
    $region8: #{tpu_custom_call.1} parent=1 // pred_region
      %s30 = ssub.s32 1024, 1024
      %31 = vsyncadd [#allocation6], %s30
      %s32 = sshll.u32 [#allocation5], 4
      %s33 = int_to_ptr.vmem [resolvable:$true] %s32
      %38 = dma.hbm_to_vmem [thread:$0]  %s1, 1024, %s33, [#allocation6], 64, 64, 4
    $region9: #{tpu_custom_call.1} parent=1 // pred_fallthru
      _
    // Predicated region
    $region10: #{tpu_custom_call.1} parent=1 // pred_check
      _
    $region11: #{tpu_custom_call.1} parent=1 // pred_check_branch
      %40 = sbr.rel (0) target = $region13
    $region12: #{tpu_custom_call.1} parent=1 // pred_region
      %s42 = ssub.s32 1024, 1024
      %43 = vsyncadd [#allocation6], %s42
      %s44 = sshll.u32 [#allocation7], 4
      %s45 = int_to_ptr.vmem [resolvable:$true] %s44
      %50 = dma.hbm_to_vmem [thread:$0]  %s2, 1024, %s45, [#allocation6], 64, 64, 4
    $region13: #{tpu_custom_call.1} parent=1 // pred_fallthru
      _
    // Predicated region
    $region14: #{tpu_custom_call.1} parent=1 // pred_check
      _
    $region15: #{tpu_custom_call.1} parent=1 // pred_check_branch
      %52 = sbr.rel (0) target = $region17
    $region16: #{tpu_custom_call.1} parent=1 // pred_region
      _
    $region17: #{tpu_custom_call.1} parent=1 // pred_fallthru
      _
    // Predicated region
    $region18: #{tpu_custom_call.1} parent=1 // pred_check
      _
    $region19: #{tpu_custom_call.1} parent=1 // pred_check_branch
      %54 = sbr.rel (0) target = $region21
    $region20: #{tpu_custom_call.1} parent=1 // pred_region
      %55 = dma.done [#allocation3], 2048
    $region21: #{tpu_custom_call.1} parent=1 // pred_fallthru
      _
    // Predicated region
    $region22: #{tpu_custom_call.1} parent=1 // pred_check
      _
    $region23: #{tpu_custom_call.1} parent=1 // pred_check_branch
      %57 = sbr.rel (0) target = $region25
    $region24: #{tpu_custom_call.1} parent=1 // pred_region
      %58 = dma.done [#allocation6], 1024
    $region25: #{tpu_custom_call.1} parent=1 // pred_fallthru
      _
    // Predicated region
    $region26: #{tpu_custom_call.1} parent=1 // pred_check
      _
    $region27: #{tpu_custom_call.1} parent=1 // pred_check_branch
      %60 = sbr.rel (0) target = $region29
    $region28: #{tpu_custom_call.1} parent=1 // pred_region
      %61 = dma.done [#allocation6], 1024
    $region29: #{tpu_custom_call.1} parent=1 // pred_fallthru
      _
    %v63 = vld [vmem:[#allocation2] sm:$0xf]
    %v64 = vld [vmem:[#allocation2 + $0x4] sm:$0xf]
    %v65 = vld [vmem:[#allocation2 + $0x8] sm:$0xf]
    %v66 = vld [vmem:[#allocation2 + $0xc] sm:$0xf]
    %v67 = vld [vmem:[#allocation2 + $0x10] sm:$0xf]
    %v68 = vld [vmem:[#allocation2 + $0x14] sm:$0xf]
    %v69 = vld [vmem:[#allocation2 + $0x18] sm:$0xf]
    %v70 = vld [vmem:[#allocation2 + $0x1c] sm:$0xf]
    %v71 = vld [vmem:[#allocation2 + $0x20] sm:$0xf]
    %v72 = vld [vmem:[#allocation2 + $0x24] sm:$0xf]
    %v73 = vld [vmem:[#allocation2 + $0x28] sm:$0xf]
    %v74 = vld [vmem:[#allocation2 + $0x2c] sm:$0xf]
    %v75 = vld [vmem:[#allocation2 + $0x30] sm:$0xf]
    %v76 = vld [vmem:[#allocation2 + $0x34] sm:$0xf]
    %v77 = vld [vmem:[#allocation2 + $0x38] sm:$0xf]
    %v78 = vld [vmem:[#allocation2 + $0x3c] sm:$0xf]
    %v79 = vld [vmem:[#allocation2 + $0x40] sm:$0xf]
    %v80 = vld [vmem:[#allocation2 + $0x44] sm:$0xf]
    %v81 = vld [vmem:[#allocation2 + $0x48] sm:$0xf]
    %v82 = vld [vmem:[#allocation2 + $0x4c] sm:$0xf]
    %v83 = vld [vmem:[#allocation2 + $0x50] sm:$0xf]
    %v84 = vld [vmem:[#allocation2 + $0x54] sm:$0xf]
    %v85 = vld [vmem:[#allocation2 + $0x58] sm:$0xf]
    %v86 = vld [vmem:[#allocation2 + $0x5c] sm:$0xf]
    %v87 = vld [vmem:[#allocation2 + $0x60] sm:$0xf]
    %v88 = vld [vmem:[#allocation2 + $0x64] sm:$0xf]
    %v89 = vld [vmem:[#allocation2 + $0x68] sm:$0xf]
    %v90 = vld [vmem:[#allocation2 + $0x6c] sm:$0xf]
    %v91 = vld [vmem:[#allocation2 + $0x70] sm:$0xf]
    %v92 = vld [vmem:[#allocation2 + $0x74] sm:$0xf]
    %v93 = vld [vmem:[#allocation2 + $0x78] sm:$0xf]
    %v94 = vld [vmem:[#allocation2 + $0x7c] sm:$0xf]
    %v95 = vld [vmem:[#allocation5] sm:$0xf]
    %v96 = vld [vmem:[#allocation5 + $0x4] sm:$0xf]
    %v97 = vld [vmem:[#allocation5 + $0x8] sm:$0xf]
    %v98 = vld [vmem:[#allocation5 + $0xc] sm:$0xf]
    %v99 = vld [vmem:[#allocation5 + $0x10] sm:$0xf]
    %v100 = vld [vmem:[#allocation5 + $0x14] sm:$0xf]
    %v101 = vld [vmem:[#allocation5 + $0x18] sm:$0xf]
    %v102 = vld [vmem:[#allocation5 + $0x1c] sm:$0xf]
    %v103 = vld [vmem:[#allocation5 + $0x20] sm:$0xf]
    %v104 = vld [vmem:[#allocation5 + $0x24] sm:$0xf]
    %v105 = vld [vmem:[#allocation5 + $0x28] sm:$0xf]
    %v106 = vld [vmem:[#allocation5 + $0x2c] sm:$0xf]
    %v107 = vld [vmem:[#allocation5 + $0x30] sm:$0xf]
    %v108 = vld [vmem:[#allocation5 + $0x34] sm:$0xf]
    %v109 = vld [vmem:[#allocation5 + $0x38] sm:$0xf]
    %v110 = vld [vmem:[#allocation5 + $0x3c] sm:$0xf]
    %v143 = vunpack.c.l.b16 %v63
    %v144 = vunpack.c.l.b16 %v64
    %v145 = vunpack.c.l.b16 %v65
    %v146 = vunpack.c.l.b16 %v66
    %v147 = vunpack.c.l.b16 %v67
    %v148 = vunpack.c.l.b16 %v68
    %v149 = vunpack.c.l.b16 %v69
    %v150 = vunpack.c.l.b16 %v70
    %v151 = vunpack.c.l.b16 %v71
    %v152 = vunpack.c.l.b16 %v72
    %v153 = vunpack.c.l.b16 %v73
    %v154 = vunpack.c.l.b16 %v74
    %v155 = vunpack.c.l.b16 %v75
    %v156 = vunpack.c.l.b16 %v76
    %v157 = vunpack.c.l.b16 %v77
    %v158 = vunpack.c.l.b16 %v78
    %v159 = vunpack.c.l.b16 %v79
    %v160 = vunpack.c.l.b16 %v80
    %v161 = vunpack.c.l.b16 %v81
    %v162 = vunpack.c.l.b16 %v82
    %v163 = vunpack.c.l.b16 %v83
    %v164 = vunpack.c.l.b16 %v84
    %v165 = vunpack.c.l.b16 %v85
    %v166 = vunpack.c.l.b16 %v86
    %v167 = vunpack.c.l.b16 %v87
    %v168 = vunpack.c.l.b16 %v88
    %v169 = vunpack.c.l.b16 %v89
    %v170 = vunpack.c.l.b16 %v90
    %v171 = vunpack.c.l.b16 %v91
    %v172 = vunpack.c.l.b16 %v92
    %v173 = vunpack.c.l.b16 %v93
    %v174 = vunpack.c.l.b16 %v94
    %v175 = vpack.c.b16 %v144, %v143
    %v176 = vpack.c.b16 %v146, %v145
    %v177 = vpack.c.b16 %v148, %v147
    %v178 = vpack.c.b16 %v150, %v149
    %v179 = vpack.c.b16 %v152, %v151
    %v180 = vpack.c.b16 %v154, %v153
    %v181 = vpack.c.b16 %v156, %v155
    %v182 = vpack.c.b16 %v158, %v157
    %v183 = vpack.c.b16 %v160, %v159
    %v184 = vpack.c.b16 %v162, %v161
    %v185 = vpack.c.b16 %v164, %v163
    %v186 = vpack.c.b16 %v166, %v165
    %v187 = vpack.c.b16 %v168, %v167
    %v188 = vpack.c.b16 %v170, %v169
    %v189 = vpack.c.b16 %v172, %v171
    %v190 = vpack.c.b16 %v174, %v173
    %v223 = vunpack.c.l.b16 %v95
    %v224 = vunpack.c.l.b16 %v96
    %v225 = vunpack.c.l.b16 %v97
    %v226 = vunpack.c.l.b16 %v98
    %v227 = vunpack.c.l.b16 %v99
    %v228 = vunpack.c.l.b16 %v100
    %v229 = vunpack.c.l.b16 %v101
    %v230 = vunpack.c.l.b16 %v102
    %v231 = vunpack.c.l.b16 %v103
    %v232 = vunpack.c.l.b16 %v104
    %v233 = vunpack.c.l.b16 %v105
    %v234 = vunpack.c.l.b16 %v106
    %v235 = vunpack.c.l.b16 %v107
    %v236 = vunpack.c.l.b16 %v108
    %v237 = vunpack.c.l.b16 %v109
    %v238 = vunpack.c.l.b16 %v110
    %v239 = vpack.c.b16 %v224, %v223
    %v240 = vpack.c.b16 %v226, %v225
    %v241 = vpack.c.b16 %v228, %v227
    %v242 = vpack.c.b16 %v230, %v229
    %v243 = vpack.c.b16 %v232, %v231
    %v244 = vpack.c.b16 %v234, %v233
    %v245 = vpack.c.b16 %v236, %v235
    %v246 = vpack.c.b16 %v238, %v237
    %255 = vmatprep.subr.bf16.mxu0 0
    %256 = vmatpush1.bf16.msra.mxu0 %v239
    %257 = vmatprep.subr.bf16.mxu0 0
    %258 = vmatpush1.bf16.msra.mxu0 %v240
    %259 = vmatprep.subr.bf16.mxu0 0
    %260 = vmatpush1.bf16.msra.mxu0 %v241
    %261 = vmatprep.subr.bf16.mxu0 0
    %262 = vmatpush1.bf16.msra.mxu0 %v242
    %263 = vmatprep.subr.bf16.mxu0 0
    %264 = vmatpush1.bf16.msra.mxu0 %v243
    %265 = vmatprep.subr.bf16.mxu0 0
    %266 = vmatpush1.bf16.msra.mxu0 %v244
    %267 = vmatprep.subr.bf16.mxu0 0
    %268 = vmatpush1.bf16.msra.mxu0 %v245
    %269 = vmatprep.subr.bf16.mxu0 0
    %270 = vmatpush1.bf16.msra.mxu0 %v246
    %271 = vmatprep.subr.bf16.mxu0 0
    %272 = vmatpush1.bf16.msra.mxu0 0
    %273 = vmatprep.subr.bf16.mxu0 0
    %274 = vmatpush1.bf16.msra.mxu0 0
    %275 = vmatprep.subr.bf16.mxu0 0
    %276 = vmatpush1.bf16.msra.mxu0 0
    %277 = vmatprep.subr.bf16.mxu0 0
    %278 = vmatpush1.bf16.msra.mxu0 0
    %279 = vmatprep.subr.bf16.mxu0 0
    %280 = vmatpush1.bf16.msra.mxu0 0
    %281 = vmatprep.subr.bf16.mxu0 0
    %282 = vmatpush1.bf16.msra.mxu0 0
    %283 = vmatprep.subr.bf16.mxu0 0
    %284 = vmatpush1.bf16.msra.mxu0 0
    %285 = vmatprep.subr.bf16.mxu0 0
    %286 = vmatpush1.bf16.msra.mxu0 0
    %287 = vmatprep.mubr.bf16.mxu0 0
    %288 = vmatmul.mubr.bf16.gmra.mrb[0].mxu0 %v175
    %v289 = vpop.f32.mrb[0].mxu0
    %v290 = vadd.f32 0.0, %v289
    %v291 = vpop.f32.mrb[0].mxu0
    %v292 = vpop.f32.mrb[0].mxu0
    %v293 = vadd.f32 0.0, %v292
    %v294 = vpop.f32.mrb[0].mxu0
    %295 = vmatprep.mubr.bf16.mxu0 0
    %296 = vmatmul.mubr.bf16.gmra.mrb[0].mxu0 %v176
    %v297 = vpop.f32.mrb[0].mxu0
    %v298 = vadd.f32 0.0, %v297
    %v299 = vpop.f32.mrb[0].mxu0
    %v300 = vpop.f32.mrb[0].mxu0
    %v301 = vadd.f32 0.0, %v300
    %v302 = vpop.f32.mrb[0].mxu0
    %303 = vmatprep.mubr.bf16.mxu0 0
    %304 = vmatmul.mubr.bf16.gmra.mrb[0].mxu0 %v177
    %v305 = vpop.f32.mrb[0].mxu0
    %v306 = vadd.f32 0.0, %v305
    %v307 = vpop.f32.mrb[0].mxu0
    %v308 = vpop.f32.mrb[0].mxu0
    %v309 = vadd.f32 0.0, %v308
    %v310 = vpop.f32.mrb[0].mxu0
    %311 = vmatprep.mubr.bf16.mxu0 0
    %312 = vmatmul.mubr.bf16.gmra.mrb[0].mxu0 %v178
    %v313 = vpop.f32.mrb[0].mxu0
    %v314 = vadd.f32 0.0, %v313
    %v315 = vpop.f32.mrb[0].mxu0
    %v316 = vpop.f32.mrb[0].mxu0
    %v317 = vadd.f32 0.0, %v316
    %v318 = vpop.f32.mrb[0].mxu0
    %319 = vmatprep.mubr.bf16.mxu0 0
    %320 = vmatmul.mubr.bf16.gmra.mrb[0].mxu0 %v179
    %v321 = vpop.f32.mrb[0].mxu0
    %v322 = vadd.f32 0.0, %v321
    %v323 = vpop.f32.mrb[0].mxu0
    %v324 = vpop.f32.mrb[0].mxu0
    %v325 = vadd.f32 0.0, %v324
    %v326 = vpop.f32.mrb[0].mxu0
    %327 = vmatprep.mubr.bf16.mxu0 0
    %328 = vmatmul.mubr.bf16.gmra.mrb[0].mxu0 %v180
    %v329 = vpop.f32.mrb[0].mxu0
    %v330 = vadd.f32 0.0, %v329
    %v331 = vpop.f32.mrb[0].mxu0
    %v332 = vpop.f32.mrb[0].mxu0
    %v333 = vadd.f32 0.0, %v332
    %v334 = vpop.f32.mrb[0].mxu0
    %335 = vmatprep.mubr.bf16.mxu0 0
    %336 = vmatmul.mubr.bf16.gmra.mrb[0].mxu0 %v181
    %v337 = vpop.f32.mrb[0].mxu0
    %v338 = vadd.f32 0.0, %v337
    %v339 = vpop.f32.mrb[0].mxu0
    %v340 = vpop.f32.mrb[0].mxu0
    %v341 = vadd.f32 0.0, %v340
    %v342 = vpop.f32.mrb[0].mxu0
    %343 = vmatprep.mubr.bf16.mxu0 0
    %344 = vmatmul.mubr.bf16.gmra.mrb[0].mxu0 %v182
    %v345 = vpop.f32.mrb[0].mxu0
    %v346 = vadd.f32 0.0, %v345
    %v347 = vpop.f32.mrb[0].mxu0
    %v348 = vpop.f32.mrb[0].mxu0
    %v349 = vadd.f32 0.0, %v348
    %v350 = vpop.f32.mrb[0].mxu0
    %351 = vmatprep.mubr.bf16.mxu0 0
    %352 = vmatmul.mubr.bf16.gmra.mrb[0].mxu0 %v183
    %v353 = vpop.f32.mrb[0].mxu0
    %v354 = vadd.f32 0.0, %v353
    %v355 = vpop.f32.mrb[0].mxu0
    %v356 = vpop.f32.mrb[0].mxu0
    %v357 = vadd.f32 0.0, %v356
    %v358 = vpop.f32.mrb[0].mxu0
    %359 = vmatprep.mubr.bf16.mxu0 0
    %360 = vmatmul.mubr.bf16.gmra.mrb[0].mxu0 %v184
    %v361 = vpop.f32.mrb[0].mxu0
    %v362 = vadd.f32 0.0, %v361
    %v363 = vpop.f32.mrb[0].mxu0
    %v364 = vpop.f32.mrb[0].mxu0
    %v365 = vadd.f32 0.0, %v364
    %v366 = vpop.f32.mrb[0].mxu0
    %367 = vmatprep.mubr.bf16.mxu0 0
    %368 = vmatmul.mubr.bf16.gmra.mrb[0].mxu0 %v185
    %v369 = vpop.f32.mrb[0].mxu0
    %v370 = vadd.f32 0.0, %v369
    %v371 = vpop.f32.mrb[0].mxu0
    %v372 = vpop.f32.mrb[0].mxu0
    %v373 = vadd.f32 0.0, %v372
    %v374 = vpop.f32.mrb[0].mxu0
    %375 = vmatprep.mubr.bf16.mxu0 0
    %376 = vmatmul.mubr.bf16.gmra.mrb[0].mxu0 %v186
    %v377 = vpop.f32.mrb[0].mxu0
    %v378 = vadd.f32 0.0, %v377
    %v379 = vpop.f32.mrb[0].mxu0
    %v380 = vpop.f32.mrb[0].mxu0
    %v381 = vadd.f32 0.0, %v380
    %v382 = vpop.f32.mrb[0].mxu0
    %383 = vmatprep.mubr.bf16.mxu0 0
    %384 = vmatmul.mubr.bf16.gmra.mrb[0].mxu0 %v187
    %v385 = vpop.f32.mrb[0].mxu0
    %v386 = vadd.f32 0.0, %v385
    %v387 = vpop.f32.mrb[0].mxu0
    %v388 = vpop.f32.mrb[0].mxu0
    %v389 = vadd.f32 0.0, %v388
    %v390 = vpop.f32.mrb[0].mxu0
    %391 = vmatprep.mubr.bf16.mxu0 0
    %392 = vmatmul.mubr.bf16.gmra.mrb[0].mxu0 %v188
    %v393 = vpop.f32.mrb[0].mxu0
    %v394 = vadd.f32 0.0, %v393
    %v395 = vpop.f32.mrb[0].mxu0
    %v396 = vpop.f32.mrb[0].mxu0
    %v397 = vadd.f32 0.0, %v396
    %v398 = vpop.f32.mrb[0].mxu0
    %399 = vmatprep.mubr.bf16.mxu0 0
    %400 = vmatmul.mubr.bf16.gmra.mrb[0].mxu0 %v189
    %v401 = vpop.f32.mrb[0].mxu0
    %v402 = vadd.f32 0.0, %v401
    %v403 = vpop.f32.mrb[0].mxu0
    %v404 = vpop.f32.mrb[0].mxu0
    %v405 = vadd.f32 0.0, %v404
    %v406 = vpop.f32.mrb[0].mxu0
    %407 = vmatprep.mubr.bf16.mxu0 0
    %408 = vmatmul.mubr.bf16.gmra.mrb[0].mxu0 %v190
    %v409 = vpop.f32.mrb[0].mxu0
    %v410 = vadd.f32 0.0, %v409
    %v411 = vpop.f32.mrb[0].mxu0
    %v412 = vpop.f32.mrb[0].mxu0
    %v413 = vadd.f32 0.0, %v412
    %v414 = vpop.f32.mrb[0].mxu0
    %415 = vdwg.mxu0
    %v416 = vpack.c.bf16 %v293, %v290
    %v417 = vpack.c.bf16 %v301, %v298
    %v418 = vpack.c.bf16 %v309, %v306
    %v419 = vpack.c.bf16 %v317, %v314
    %v420 = vpack.c.bf16 %v325, %v322
    %v421 = vpack.c.bf16 %v333, %v330
    %v422 = vpack.c.bf16 %v341, %v338
    %v423 = vpack.c.bf16 %v349, %v346
    %v424 = vpack.c.bf16 %v357, %v354
    %v425 = vpack.c.bf16 %v365, %v362
    %v426 = vpack.c.bf16 %v373, %v370
    %v427 = vpack.c.bf16 %v381, %v378
    %v428 = vpack.c.bf16 %v389, %v386
    %v429 = vpack.c.bf16 %v397, %v394
    %v430 = vpack.c.bf16 %v405, %v402
    %v431 = vpack.c.bf16 %v413, %v410
    %v448 = vunpack.c.l.b16 %v416
    %v449 = vunpack.c.h.b16 %v416
    %v450 = vunpack.c.l.b16 %v417
    %v451 = vunpack.c.h.b16 %v417
    %v452 = vunpack.c.l.b16 %v418
    %v453 = vunpack.c.h.b16 %v418
    %v454 = vunpack.c.l.b16 %v419
    %v455 = vunpack.c.h.b16 %v419
    %v456 = vunpack.c.l.b16 %v420
    %v457 = vunpack.c.h.b16 %v420
    %v458 = vunpack.c.l.b16 %v421
    %v459 = vunpack.c.h.b16 %v421
    %v460 = vunpack.c.l.b16 %v422
    %v461 = vunpack.c.h.b16 %v422
    %v462 = vunpack.c.l.b16 %v423
    %v463 = vunpack.c.h.b16 %v423
    %v464 = vunpack.c.l.b16 %v424
    %v465 = vunpack.c.h.b16 %v424
    %v466 = vunpack.c.l.b16 %v425
    %v467 = vunpack.c.h.b16 %v425
    %v468 = vunpack.c.l.b16 %v426
    %v469 = vunpack.c.h.b16 %v426
    %v470 = vunpack.c.l.b16 %v427
    %v471 = vunpack.c.h.b16 %v427
    %v472 = vunpack.c.l.b16 %v428
    %v473 = vunpack.c.h.b16 %v428
    %v474 = vunpack.c.l.b16 %v429
    %v475 = vunpack.c.h.b16 %v429
    %v476 = vunpack.c.l.b16 %v430
    %v477 = vunpack.c.h.b16 %v430
    %v478 = vunpack.c.l.b16 %v431
    %v479 = vunpack.c.h.b16 %v431
    %v480 = vpack.c.b16 %v448, %v448
    %v481 = vpack.c.b16 %v449, %v449
    %v482 = vpack.c.b16 %v450, %v450
    %v483 = vpack.c.b16 %v451, %v451
    %v484 = vpack.c.b16 %v452, %v452
    %v485 = vpack.c.b16 %v453, %v453
    %v486 = vpack.c.b16 %v454, %v454
    %v487 = vpack.c.b16 %v455, %v455
    %v488 = vpack.c.b16 %v456, %v456
    %v489 = vpack.c.b16 %v457, %v457
    %v490 = vpack.c.b16 %v458, %v458
    %v491 = vpack.c.b16 %v459, %v459
    %v492 = vpack.c.b16 %v460, %v460
    %v493 = vpack.c.b16 %v461, %v461
    %v494 = vpack.c.b16 %v462, %v462
    %v495 = vpack.c.b16 %v463, %v463
    %v496 = vpack.c.b16 %v464, %v464
    %v497 = vpack.c.b16 %v465, %v465
    %v498 = vpack.c.b16 %v466, %v466
    %v499 = vpack.c.b16 %v467, %v467
    %v500 = vpack.c.b16 %v468, %v468
    %v501 = vpack.c.b16 %v469, %v469
    %v502 = vpack.c.b16 %v470, %v470
    %v503 = vpack.c.b16 %v471, %v471
    %v504 = vpack.c.b16 %v472, %v472
    %v505 = vpack.c.b16 %v473, %v473
    %v506 = vpack.c.b16 %v474, %v474
    %v507 = vpack.c.b16 %v475, %v475
    %v508 = vpack.c.b16 %v476, %v476
    %v509 = vpack.c.b16 %v477, %v477
    %v510 = vpack.c.b16 %v478, %v478
    %v511 = vpack.c.b16 %v479, %v479
    %544 = vst [vmem:[#allocation8] sm:$0xf] %v480
    %545 = vst [vmem:[#allocation8 + $0x4] sm:$0xf] %v481
    %546 = vst [vmem:[#allocation8 + $0x8] sm:$0xf] %v482
    %547 = vst [vmem:[#allocation8 + $0xc] sm:$0xf] %v483
    %548 = vst [vmem:[#allocation8 + $0x10] sm:$0xf] %v484
    %549 = vst [vmem:[#allocation8 + $0x14] sm:$0xf] %v485
    %550 = vst [vmem:[#allocation8 + $0x18] sm:$0xf] %v486
    %551 = vst [vmem:[#allocation8 + $0x1c] sm:$0xf] %v487
    %552 = vst [vmem:[#allocation8 + $0x20] sm:$0xf] %v488
    %553 = vst [vmem:[#allocation8 + $0x24] sm:$0xf] %v489
    %554 = vst [vmem:[#allocation8 + $0x28] sm:$0xf] %v490
    %555 = vst [vmem:[#allocation8 + $0x2c] sm:$0xf] %v491
    %556 = vst [vmem:[#allocation8 + $0x30] sm:$0xf] %v492
    %557 = vst [vmem:[#allocation8 + $0x34] sm:$0xf] %v493
    %558 = vst [vmem:[#allocation8 + $0x38] sm:$0xf] %v494
    %559 = vst [vmem:[#allocation8 + $0x3c] sm:$0xf] %v495
    %560 = vst [vmem:[#allocation8 + $0x40] sm:$0xf] %v496
    %561 = vst [vmem:[#allocation8 + $0x44] sm:$0xf] %v497
    %562 = vst [vmem:[#allocation8 + $0x48] sm:$0xf] %v498
    %563 = vst [vmem:[#allocation8 + $0x4c] sm:$0xf] %v499
    %564 = vst [vmem:[#allocation8 + $0x50] sm:$0xf] %v500
    %565 = vst [vmem:[#allocation8 + $0x54] sm:$0xf] %v501
    %566 = vst [vmem:[#allocation8 + $0x58] sm:$0xf] %v502
    %567 = vst [vmem:[#allocation8 + $0x5c] sm:$0xf] %v503
    %568 = vst [vmem:[#allocation8 + $0x60] sm:$0xf] %v504
    %569 = vst [vmem:[#allocation8 + $0x64] sm:$0xf] %v505
    %570 = vst [vmem:[#allocation8 + $0x68] sm:$0xf] %v506
    %571 = vst [vmem:[#allocation8 + $0x6c] sm:$0xf] %v507
    %572 = vst [vmem:[#allocation8 + $0x70] sm:$0xf] %v508
    %573 = vst [vmem:[#allocation8 + $0x74] sm:$0xf] %v509
    %574 = vst [vmem:[#allocation8 + $0x78] sm:$0xf] %v510
    %575 = vst [vmem:[#allocation8 + $0x7c] sm:$0xf] %v511
    %v576 = vld [vmem:[#allocation7] sm:$0xf]
    %v577 = vld [vmem:[#allocation7 + $0x4] sm:$0xf]
    %v578 = vld [vmem:[#allocation7 + $0x8] sm:$0xf]
    %v579 = vld [vmem:[#allocation7 + $0xc] sm:$0xf]
    %v580 = vld [vmem:[#allocation7 + $0x10] sm:$0xf]
    %v581 = vld [vmem:[#allocation7 + $0x14] sm:$0xf]
    %v582 = vld [vmem:[#allocation7 + $0x18] sm:$0xf]
    %v583 = vld [vmem:[#allocation7 + $0x1c] sm:$0xf]
    %v584 = vld [vmem:[#allocation7 + $0x20] sm:$0xf]
    %v585 = vld [vmem:[#allocation7 + $0x24] sm:$0xf]
    %v586 = vld [vmem:[#allocation7 + $0x28] sm:$0xf]
    %v587 = vld [vmem:[#allocation7 + $0x2c] sm:$0xf]
    %v588 = vld [vmem:[#allocation7 + $0x30] sm:$0xf]
    %v589 = vld [vmem:[#allocation7 + $0x34] sm:$0xf]
    %v590 = vld [vmem:[#allocation7 + $0x38] sm:$0xf]
    %v591 = vld [vmem:[#allocation7 + $0x3c] sm:$0xf]
    %v592 = vld [vmem:[%s3] sm:$0x1]
    %v594 = vlaneseq
    %v595 = vshrl.u32 %v594, 7
    %v596 = vsub.s32 0, %v595
    %v597 = vrot.slane %v592, %v596
    %v615 = vunpack.c.l.b16 %v576
    %v616 = vunpack.c.l.b16 %v577
    %v617 = vunpack.c.l.b16 %v578
    %v618 = vunpack.c.l.b16 %v579
    %v619 = vunpack.c.l.b16 %v580
    %v620 = vunpack.c.l.b16 %v581
    %v621 = vunpack.c.l.b16 %v582
    %v622 = vunpack.c.l.b16 %v583
    %v623 = vunpack.c.l.b16 %v584
    %v624 = vunpack.c.l.b16 %v585
    %v625 = vunpack.c.l.b16 %v586
    %v626 = vunpack.c.l.b16 %v587
    %v627 = vunpack.c.l.b16 %v588
    %v628 = vunpack.c.l.b16 %v589
    %v629 = vunpack.c.l.b16 %v590
    %v630 = vunpack.c.l.b16 %v591
    %v631 = vpack.c.b16 %v616, %v615
    %v632 = vpack.c.b16 %v618, %v617
    %v633 = vpack.c.b16 %v620, %v619
    %v634 = vpack.c.b16 %v622, %v621
    %v635 = vpack.c.b16 %v624, %v623
    %v636 = vpack.c.b16 %v626, %v625
    %v637 = vpack.c.b16 %v628, %v627
    %v638 = vpack.c.b16 %v630, %v629
    %647 = vmatprep.subr.bf16.mxu0 0
    %648 = vmatpush1.bf16.msra.mxu0 %v631
    %649 = vmatprep.subr.bf16.mxu0 0
    %650 = vmatpush1.bf16.msra.mxu0 %v632
    %651 = vmatprep.subr.bf16.mxu0 0
    %652 = vmatpush1.bf16.msra.mxu0 %v633
    %653 = vmatprep.subr.bf16.mxu0 0
    %654 = vmatpush1.bf16.msra.mxu0 %v634
    %655 = vmatprep.subr.bf16.mxu0 0
    %656 = vmatpush1.bf16.msra.mxu0 %v635
    %657 = vmatprep.subr.bf16.mxu0 0
    %658 = vmatpush1.bf16.msra.mxu0 %v636
    %659 = vmatprep.subr.bf16.mxu0 0
    %660 = vmatpush1.bf16.msra.mxu0 %v637
    %661 = vmatprep.subr.bf16.mxu0 0
    %662 = vmatpush1.bf16.msra.mxu0 %v638
    %663 = vmatprep.subr.bf16.mxu0 0
    %664 = vmatpush1.bf16.msra.mxu0 0
    %665 = vmatprep.subr.bf16.mxu0 0
    %666 = vmatpush1.bf16.msra.mxu0 0
    %667 = vmatprep.subr.bf16.mxu0 0
    %668 = vmatpush1.bf16.msra.mxu0 0
    %669 = vmatprep.subr.bf16.mxu0 0
    %670 = vmatpush1.bf16.msra.mxu0 0
    %671 = vmatprep.subr.bf16.mxu0 0
    %672 = vmatpush1.bf16.msra.mxu0 0
    %673 = vmatprep.subr.bf16.mxu0 0
    %674 = vmatpush1.bf16.msra.mxu0 0
    %675 = vmatprep.subr.bf16.mxu0 0
    %676 = vmatpush1.bf16.msra.mxu0 0
    %677 = vmatprep.subr.bf16.mxu0 0
    %678 = vmatpush1.bf16.msra.mxu0 0
    %679 = vmatprep.mubr.bf16.mxu0 0
    %680 = vmatmul.mubr.bf16.gmra.mrb[0].mxu0 %v175
    %v681 = vpop.f32.mrb[0].mxu0
    %v682 = vadd.f32 %v597, %v681
    %v683 = vpop.f32.mrb[0].mxu0
    %v684 = vpop.f32.mrb[0].mxu0
    %v685 = vadd.f32 %v597, %v684
    %v686 = vpop.f32.mrb[0].mxu0
    %687 = vmatprep.mubr.bf16.mxu0 0
    %688 = vmatmul.mubr.bf16.gmra.mrb[0].mxu0 %v176
    %v689 = vpop.f32.mrb[0].mxu0
    %v690 = vadd.f32 %v597, %v689
    %v691 = vpop.f32.mrb[0].mxu0
    %v692 = vpop.f32.mrb[0].mxu0
    %v693 = vadd.f32 %v597, %v692
    %v694 = vpop.f32.mrb[0].mxu0
    %695 = vmatprep.mubr.bf16.mxu0 0
    %696 = vmatmul.mubr.bf16.gmra.mrb[0].mxu0 %v177
    %v697 = vpop.f32.mrb[0].mxu0
    %v698 = vadd.f32 %v597, %v697
    %v699 = vpop.f32.mrb[0].mxu0
    %v700 = vpop.f32.mrb[0].mxu0
    %v701 = vadd.f32 %v597, %v700
    %v702 = vpop.f32.mrb[0].mxu0
    %703 = vmatprep.mubr.bf16.mxu0 0
    %704 = vmatmul.mubr.bf16.gmra.mrb[0].mxu0 %v178
    %v705 = vpop.f32.mrb[0].mxu0
    %v706 = vadd.f32 %v597, %v705
    %v707 = vpop.f32.mrb[0].mxu0
    %v708 = vpop.f32.mrb[0].mxu0
    %v709 = vadd.f32 %v597, %v708
    %v710 = vpop.f32.mrb[0].mxu0
    %711 = vmatprep.mubr.bf16.mxu0 0
    %712 = vmatmul.mubr.bf16.gmra.mrb[0].mxu0 %v179
    %v713 = vpop.f32.mrb[0].mxu0
    %v714 = vadd.f32 %v597, %v713
    %v715 = vpop.f32.mrb[0].mxu0
    %v716 = vpop.f32.mrb[0].mxu0
    %v717 = vadd.f32 %v597, %v716
    %v718 = vpop.f32.mrb[0].mxu0
    %719 = vmatprep.mubr.bf16.mxu0 0
    %720 = vmatmul.mubr.bf16.gmra.mrb[0].mxu0 %v180
    %v721 = vpop.f32.mrb[0].mxu0
    %v722 = vadd.f32 %v597, %v721
    %v723 = vpop.f32.mrb[0].mxu0
    %v724 = vpop.f32.mrb[0].mxu0
    %v725 = vadd.f32 %v597, %v724
    %v726 = vpop.f32.mrb[0].mxu0
    %727 = vmatprep.mubr.bf16.mxu0 0
    %728 = vmatmul.mubr.bf16.gmra.mrb[0].mxu0 %v181
    %v729 = vpop.f32.mrb[0].mxu0
    %v730 = vadd.f32 %v597, %v729
    %v731 = vpop.f32.mrb[0].mxu0
    %v732 = vpop.f32.mrb[0].mxu0
    %v733 = vadd.f32 %v597, %v732
    %v734 = vpop.f32.mrb[0].mxu0
    %735 = vmatprep.mubr.bf16.mxu0 0
    %736 = vmatmul.mubr.bf16.gmra.mrb[0].mxu0 %v182
    %v737 = vpop.f32.mrb[0].mxu0
    %v738 = vadd.f32 %v597, %v737
    %v739 = vpop.f32.mrb[0].mxu0
    %v740 = vpop.f32.mrb[0].mxu0
    %v741 = vadd.f32 %v597, %v740
    %v742 = vpop.f32.mrb[0].mxu0
    %743 = vmatprep.mubr.bf16.mxu0 0
    %744 = vmatmul.mubr.bf16.gmra.mrb[0].mxu0 %v183
    %v745 = vpop.f32.mrb[0].mxu0
    %v746 = vadd.f32 %v597, %v745
    %v747 = vpop.f32.mrb[0].mxu0
    %v748 = vpop.f32.mrb[0].mxu0
    %v749 = vadd.f32 %v597, %v748
    %v750 = vpop.f32.mrb[0].mxu0
    %751 = vmatprep.mubr.bf16.mxu0 0
    %752 = vmatmul.mubr.bf16.gmra.mrb[0].mxu0 %v184
    %v753 = vpop.f32.mrb[0].mxu0
    %v754 = vadd.f32 %v597, %v753
    %v755 = vpop.f32.mrb[0].mxu0
    %v756 = vpop.f32.mrb[0].mxu0
    %v757 = vadd.f32 %v597, %v756
    %v758 = vpop.f32.mrb[0].mxu0
    %759 = vmatprep.mubr.bf16.mxu0 0
    %760 = vmatmul.mubr.bf16.gmra.mrb[0].mxu0 %v185
    %v761 = vpop.f32.mrb[0].mxu0
    %v762 = vadd.f32 %v597, %v761
    %v763 = vpop.f32.mrb[0].mxu0
    %v764 = vpop.f32.mrb[0].mxu0
    %v765 = vadd.f32 %v597, %v764
    %v766 = vpop.f32.mrb[0].mxu0
    %767 = vmatprep.mubr.bf16.mxu0 0
    %768 = vmatmul.mubr.bf16.gmra.mrb[0].mxu0 %v186
    %v769 = vpop.f32.mrb[0].mxu0
    %v770 = vadd.f32 %v597, %v769
    %v771 = vpop.f32.mrb[0].mxu0
    %v772 = vpop.f32.mrb[0].mxu0
    %v773 = vadd.f32 %v597, %v772
    %v774 = vpop.f32.mrb[0].mxu0
    %775 = vmatprep.mubr.bf16.mxu0 0
    %776 = vmatmul.mubr.bf16.gmra.mrb[0].mxu0 %v187
    %v777 = vpop.f32.mrb[0].mxu0
    %v778 = vadd.f32 %v597, %v777
    %v779 = vpop.f32.mrb[0].mxu0
    %v780 = vpop.f32.mrb[0].mxu0
    %v781 = vadd.f32 %v597, %v780
    %v782 = vpop.f32.mrb[0].mxu0
    %783 = vmatprep.mubr.bf16.mxu0 0
    %784 = vmatmul.mubr.bf16.gmra.mrb[0].mxu0 %v188
    %v785 = vpop.f32.mrb[0].mxu0
    %v786 = vadd.f32 %v597, %v785
    %v787 = vpop.f32.mrb[0].mxu0
    %v788 = vpop.f32.mrb[0].mxu0
    %v789 = vadd.f32 %v597, %v788
    %v790 = vpop.f32.mrb[0].mxu0
    %791 = vmatprep.mubr.bf16.mxu0 0
    %792 = vmatmul.mubr.bf16.gmra.mrb[0].mxu0 %v189
    %v793 = vpop.f32.mrb[0].mxu0
    %v794 = vadd.f32 %v597, %v793
    %v795 = vpop.f32.mrb[0].mxu0
    %v796 = vpop.f32.mrb[0].mxu0
    %v797 = vadd.f32 %v597, %v796
    %v798 = vpop.f32.mrb[0].mxu0
    %799 = vmatprep.mubr.bf16.mxu0 0
    %800 = vmatmul.mubr.bf16.gmra.mrb[0].mxu0 %v190
    %v801 = vpop.f32.mrb[0].mxu0
    %v802 = vadd.f32 %v597, %v801
    %v803 = vpop.f32.mrb[0].mxu0
    %v804 = vpop.f32.mrb[0].mxu0
    %v805 = vadd.f32 %v597, %v804
    %v806 = vpop.f32.mrb[0].mxu0
    %807 = vdwg.mxu0
    %808 = vst [vmem:[#allocation9] sm:$0xff] %v682
    %809 = vst [vmem:[#allocation9 + $0x8] sm:$0xff] %v685
    %810 = vst [vmem:[#allocation9 + $0x10] sm:$0xff] %v690
    %811 = vst [vmem:[#allocation9 + $0x18] sm:$0xff] %v693
    %812 = vst [vmem:[#allocation9 + $0x20] sm:$0xff] %v698
    %813 = vst [vmem:[#allocation9 + $0x28] sm:$0xff] %v701
    %814 = vst [vmem:[#allocation9 + $0x30] sm:$0xff] %v706
    %815 = vst [vmem:[#allocation9 + $0x38] sm:$0xff] %v709
    %816 = vst [vmem:[#allocation9 + $0x40] sm:$0xff] %v714
    %817 = vst [vmem:[#allocation9 + $0x48] sm:$0xff] %v717
    %818 = vst [vmem:[#allocation9 + $0x50] sm:$0xff] %v722
    %819 = vst [vmem:[#allocation9 + $0x58] sm:$0xff] %v725
    %820 = vst [vmem:[#allocation9 + $0x60] sm:$0xff] %v730
    %821 = vst [vmem:[#allocation9 + $0x68] sm:$0xff] %v733
    %822 = vst [vmem:[#allocation9 + $0x70] sm:$0xff] %v738
    %823 = vst [vmem:[#allocation9 + $0x78] sm:$0xff] %v741
    %824 = vst [vmem:[#allocation9 + $0x80] sm:$0xff] %v746
    %825 = vst [vmem:[#allocation9 + $0x88] sm:$0xff] %v749
    %826 = vst [vmem:[#allocation9 + $0x90] sm:$0xff] %v754
    %827 = vst [vmem:[#allocation9 + $0x98] sm:$0xff] %v757
    %828 = vst [vmem:[#allocation9 + $0xa0] sm:$0xff] %v762
    %829 = vst [vmem:[#allocation9 + $0xa8] sm:$0xff] %v765
    %830 = vst [vmem:[#allocation9 + $0xb0] sm:$0xff] %v770
    %831 = vst [vmem:[#allocation9 + $0xb8] sm:$0xff] %v773
    %832 = vst [vmem:[#allocation9 + $0xc0] sm:$0xff] %v778
    %833 = vst [vmem:[#allocation9 + $0xc8] sm:$0xff] %v781
    %834 = vst [vmem:[#allocation9 + $0xd0] sm:$0xff] %v786
    %835 = vst [vmem:[#allocation9 + $0xd8] sm:$0xff] %v789
    %836 = vst [vmem:[#allocation9 + $0xe0] sm:$0xff] %v794
    %837 = vst [vmem:[#allocation9 + $0xe8] sm:$0xff] %v797
    %838 = vst [vmem:[#allocation9 + $0xf0] sm:$0xff] %v802
    %839 = vst [vmem:[#allocation9 + $0xf8] sm:$0xff] %v805
    // Predicated region
    $region30: #{tpu_custom_call.1} parent=1 // pred_check
      _
    $region31: #{tpu_custom_call.1} parent=1 // pred_check_branch
      %841 = sbr.rel (0) target = $region33
    $region32: #{tpu_custom_call.1} parent=1 // pred_region
      %s843 = ssub.s32 2048, 2048
      %844 = vsyncadd [#allocation4], %s843
      %s845 = sshll.u32 [#allocation8], 4
      %s846 = int_to_ptr.vmem [resolvable:$true] %s845
      %851 = dma.vmem_to_hbm [thread:$0]  %s846, 2048, %s4, [#allocation4], 64, 64, 4
    $region33: #{tpu_custom_call.1} parent=1 // pred_fallthru
      _
    // Predicated region
    $region34: #{tpu_custom_call.1} parent=1 // pred_check
      _
    $region35: #{tpu_custom_call.1} parent=1 // pred_check_branch
      %853 = sbr.rel (0) target = $region37
    $region36: #{tpu_custom_call.1} parent=1 // pred_region
      %s855 = ssub.s32 4096, 4096
      %856 = vsyncadd [#allocation10], %s855
      %s857 = sshll.u32 [#allocation9], 4
      %s858 = int_to_ptr.vmem [resolvable:$true] %s857
      %863 = dma.vmem_to_hbm [thread:$0]  %s858, 4096, %s5, [#allocation10], 128, 128, 8
    $region37: #{tpu_custom_call.1} parent=1 // pred_fallthru
      _
    // Predicated region
    $region38: #{tpu_custom_call.1} parent=1 // pred_check
      _
    $region39: #{tpu_custom_call.1} parent=1 // pred_check_branch
      %865 = sbr.rel (0) target = $region41
    $region40: #{tpu_custom_call.1} parent=1 // pred_region
      %866 = dma.done [#allocation4], 2048
    $region41: #{tpu_custom_call.1} parent=1 // pred_fallthru
      _
    // Predicated region
    $region42: #{tpu_custom_call.1} parent=1 // pred_check
      _
    $region43: #{tpu_custom_call.1} parent=1 // pred_check_branch
      %868 = sbr.rel (0) target = $region45
    $region44: #{tpu_custom_call.1} parent=1 // pred_region
      %869 = dma.done [#allocation10], 4096
    $region45: #{tpu_custom_call.1} parent=1 // pred_fallthru
      _
    %870 = vsyncpa [#allocation3], 1
    %871 = vsyncpa [#allocation6], 1
    %872 = vsyncpa [#allocation4], 1
    %873 = vsyncpa [#allocation10], 1

</llo_original>
